<compile_context>
chip_gen: v6e
topology: v6e:2x2x1
jax: 0.10.0
libtpu: 0.0.40
codegen_flags: <defaults>
</compile_context>

<pallas_src>
import functools

import jax
import jax.numpy as jnp
from jax.experimental import pallas as pl
from jax.experimental.pallas import tpu as pltpu


def _round_up(v, m):
    return (v + m - 1) // m * m


def _cdiv(a, b):
    return (a + b - 1) // b


def _padded_tile_bytes(rows, cols, dtype):
    """VMEM footprint of a (rows, cols) tile after (sublane, lane) padding."""
    itemsize = jnp.dtype(dtype).itemsize
    sub = 16 if itemsize == 2 else 8
    return _round_up(max(rows, 1), sub) * _round_up(max(cols, 1), 128) * itemsize


def _nerf_encoding_kernel(xT_ref, w1t_ref, b1t_ref, w2t_ref, b2t_ref, o_ref, *,
                          vpu_layer1: bool):
    # xT_ref : (in_dim, block_rows)   -- batch on the lane axis
    # w1t_ref: (hidden, in_dim)   b1t_ref: (hidden, 1)
    # w2t_ref: (out_dim, hidden)  b2t_ref: (out_dim, 1)
    # o_ref  : (out_dim, block_rows)
    in_dim, rows = xT_ref.shape
    hidden = w1t_ref.shape[0]

    b1 = b1t_ref[...].astype(jnp.float32)            # (hidden, 1)

    if vpu_layer1:
        # Tiny contraction dim: in_dim broadcast FMAs on the VPU.
        # xT row k is a cheap sublane broadcast; w1t column k is a small lane
        # broadcast of a (hidden, 1) column.
        xT = xT_ref[...].astype(jnp.float32)
        w1t = w1t_ref[...].astype(jnp.float32)
        h = jnp.broadcast_to(b1, (hidden, rows))
        for k in range(in_dim):                       # static python loop (in_dim)
            h = h + w1t[:, k:k + 1] * xT[k:k + 1, :]
    else:
        h = jnp.dot(w1t_ref[...], xT_ref[...].astype(w1t_ref.dtype),
                    preferred_element_type=jnp.float32) + b1

    h = jnp.maximum(h, 0.0)                           # ReLU in f32 (VPU)

    # Layer 2 on the MXU; result (out_dim, block_rows) is already lane-dense so
    # there is no store amplification.  Accumulate in f32.
    out = jnp.dot(w2t_ref[...], h.astype(w2t_ref.dtype),
                  preferred_element_type=jnp.float32) + b2t_ref[...].astype(jnp.float32)
    o_ref[...] = out.astype(o_ref.dtype)


@functools.partial(jax.jit, static_argnames=("tm", "io_dtype"))
def nerf_encoding(x, w1, b1, w2, b2, *, tm=2048, io_dtype=None):
    """Pallas TPU forward pass of NeRFEncoding.

    x : [N, in_dim]; w1 : [in_dim, W]; b1 : [W] or [1, W]; w2 : [W, out_dim];
    b2 : [out_dim] or [1, out_dim].  Returns [N, out_dim].
    """
    n, in_dim = x.shape
    hidden = w1.shape[1]
    out_dim = w2.shape[1]

    # Optional bf16 I/O for the memory-bound path; accumulation stays f32.
    if io_dtype is not None:
        x = x.astype(io_dtype)
    out_dtype = x.dtype
    mma_dtype = jnp.bfloat16 if out_dtype == jnp.bfloat16 else jnp.float32

    # Transposed parameters (tiny, done once by XLA).
    w1t = w1.T.astype(mma_dtype)                      # (hidden, in_dim)
    w2t = w2.T.astype(mma_dtype)                      # (out_dim, hidden)
    b1t = b1.reshape(hidden, 1).astype(jnp.float32)   # (hidden, 1)
    b2t = b2.reshape(out_dim, 1).astype(jnp.float32)  # (out_dim, 1)

    # --- row tiling: batch on the lane axis -> multiple of 128 ----------------
    LANE = 128
    n_min_pad = _round_up(n, LANE)
    block_rows = min(_round_up(max(tm, LANE), LANE), n_min_pad)
    # Keep >= 2 grid steps when the batch allows it (v7x has 2 TCs sharing the
    # "parallel" grid axis); harmless on v5e/v6e.
    if n_min_pad >= 2 * LANE:
        block_rows = min(block_rows, _round_up(_cdiv(n, 2), LANE))
    n_pad = _round_up(n, block_rows)
    grid = (n_pad // block_rows,)

    # Transpose + pad x once in the wrapper (cheap vs. the old 128-lane-padded
    # output writeback); kernel reads lane-dense (in_dim, block_rows) tiles.
    xT = x.T
    if n_pad != n:
        xT = jnp.pad(xT, ((0, 0), (0, n_pad - n)))

    # --- cost hint (kernel is memory-bound); counts bytes actually moved ------
    io_itemsize = jnp.dtype(out_dtype).itemsize
    w_itemsize = jnp.dtype(mma_dtype).itemsize
    cost = pl.CostEstimate(
        flops=2 * n * (in_dim * hidden + hidden * out_dim),
        transcendentals=0,
        bytes_accessed=n_pad * (in_dim + out_dim) * io_itemsize
        + (in_dim * hidden + hidden * out_dim) * w_itemsize
        + (hidden + out_dim) * 4,
    )

    # --- scoped VMEM: only raise when padded tiles need it; cap per-generation -
    tile_bytes = (
        2 * (_padded_tile_bytes(in_dim, block_rows, out_dtype)       # xT (dbl buf)
             + _padded_tile_bytes(out_dim, block_rows, out_dtype))   # out (dbl buf)
        + 2 * (_padded_tile_bytes(hidden, in_dim, mma_dtype)
               + _padded_tile_bytes(hidden, 1, jnp.float32)
               + _padded_tile_bytes(out_dim, hidden, mma_dtype)
               + _padded_tile_bytes(out_dim, 1, jnp.float32))
        + _padded_tile_bytes(hidden, block_rows, jnp.float32)        # h (in-kernel)
    )
    vmem_limit = None
    if tile_bytes > 10 * 1024 * 1024:       # below v5e's 16 MiB default scoped VMEM
        try:
            cap = int(pltpu.get_tpu_info().vmem_capacity_bytes * 3 // 4)
        except Exception:
            cap = 48 * 1024 * 1024          # safe on v7x (64 MiB physical per TC)
        vmem_limit = int(min(max(2 * tile_bytes, 16 * 1024 * 1024), cap))

    kernel = functools.partial(_nerf_encoding_kernel, vpu_layer1=(in_dim <= 8))

    out_t = pl.pallas_call(
        kernel,
        out_shape=jax.ShapeDtypeStruct((out_dim, n_pad), out_dtype),
        grid_spec=pltpu.PrefetchScalarGridSpec(
            num_scalar_prefetch=0,
            grid=grid,
            in_specs=[
                pl.BlockSpec((in_dim, block_rows), lambda i: (0, i)),   # xT tile
                pl.BlockSpec((hidden, in_dim), lambda i: (0, 0)),       # W1^T (resident)
                pl.BlockSpec((hidden, 1), lambda i: (0, 0)),            # b1
                pl.BlockSpec((out_dim, hidden), lambda i: (0, 0)),      # W2^T (resident)
                pl.BlockSpec((out_dim, 1), lambda i: (0, 0)),           # b2
            ],
            out_specs=pl.BlockSpec((out_dim, block_rows), lambda i: (0, i)),
        ),
        compiler_params=pltpu.CompilerParams(
            dimension_semantics=("parallel",),
            vmem_limit_bytes=vmem_limit,
        ),
        cost_estimate=cost,
    )(xT, w1t, b1t, w2t, b2t)

    # Un-transpose and drop batch padding.
    return out_t[:, :n].T


def init_params(key, in_dim, hidden, out_dim, dtype=jnp.float32):
    """Deterministic PyTorch-style (uniform +/- 1/sqrt(fan_in)) init."""
    k1, k2, k3, k4 = jax.random.split(key, 4)
    bound1 = 1.0 / jnp.sqrt(in_dim)
    bound2 = 1.0 / jnp.sqrt(hidden)
    w1 = jax.random.uniform(k1, (in_dim, hidden), dtype, -bound1, bound1)
    b1 = jax.random.uniform(k2, (1, hidden), dtype, -bound1, bound1)
    w2 = jax.random.uniform(k3, (hidden, out_dim), dtype, -bound2, bound2)
    b2 = jax.random.uniform(k4, (1, out_dim), dtype, -bound2, bound2)
    return w1, b1, w2, b2


if __name__ == "__main__":
    key = jax.random.PRNGKey(0)
    kx, kx2, kp = jax.random.split(key, 3)

    # NeRF-style small shapes: 3-D positions, hidden width 32, 4 outputs.
    in_dim, hidden, out_dim = 3, 32, 4
    w1, b1, w2, b2 = init_params(kp, in_dim, hidden, out_dim)

    # --- case 1: tiny batch (single grid step), f32 I/O ----------------------
    n = 16
    x = jax.random.normal(kx, (n, in_dim), jnp.float32)
    ref = jnp.maximum(x @ w1 + b1, 0.0) @ w2 + b2
    out = jax.block_until_ready(nerf_encoding(x, w1, b1, w2, b2))
    assert out.shape == (n, out_dim)
    assert jnp.allclose(out, ref, atol=1e-5, rtol=1e-5), "f32 mismatch vs reference"

    # --- case 2: non-multiple batch (padding + multi-step grid), f32 I/O -----
    n2 = 300
    x2 = jax.random.normal(kx2, (n2, in_dim), jnp.float32)
    ref2 = jnp.maximum(x2 @ w1 + b1, 0.0) @ w2 + b2
    out2 = jax.block_until_ready(nerf_encoding(x2, w1, b1, w2, b2))
    assert out2.shape == (n2, out_dim)
    assert jnp.allclose(out2, ref2, atol=1e-5, rtol=1e-5), "f32 multi-step mismatch"

    # --- case 3: bf16 I/O path (halves HBM traffic); looser tolerance --------
    out_bf16 = jax.block_until_ready(
        nerf_encoding(x2, w1, b1, w2, b2, io_dtype=jnp.bfloat16))
    assert out_bf16.dtype == jnp.bfloat16
    assert jnp.allclose(out_bf16.astype(jnp.float32), ref2, atol=5e-2, rtol=5e-2), \
        "bf16 mismatch vs reference"

    print("KERNEL_OK")
</pallas_src>

<mosaic_0001>
module attributes {stable_mosaic.version = 11 : i64} {
  func.func @_nerf_encoding_kernel(%arg0: i32, %arg1: memref<3x128xf32, #tpu.memory_space<vmem>>, %arg2: memref<32x3xf32, #tpu.memory_space<vmem>>, %arg3: memref<32x1xf32, #tpu.memory_space<vmem>>, %arg4: memref<4x32xf32, #tpu.memory_space<vmem>>, %arg5: memref<4x1xf32, #tpu.memory_space<vmem>>, %arg6: memref<4x128xf32, #tpu.memory_space<vmem>>) attributes {dimension_semantics = [#tpu.dimension_semantics<parallel>], iteration_bounds = array<i64: 1>, scalar_prefetch = 0 : i64, scratch_operands = 0 : i64, tpu.core_type = #tpu.core_type<tc>, window_params = [{transform_indices = @transform_0, window_bounds = array<i64: 3, 128>}, {pipeline_mode = #tpu.pipeline_mode<synchronous>, transform_indices = @transform_1, window_bounds = array<i64: 32, 3>}, {pipeline_mode = #tpu.pipeline_mode<synchronous>, transform_indices = @transform_2, window_bounds = array<i64: 32, 1>}, {pipeline_mode = #tpu.pipeline_mode<synchronous>, transform_indices = @transform_3, window_bounds = array<i64: 4, 32>}, {pipeline_mode = #tpu.pipeline_mode<synchronous>, transform_indices = @transform_4, window_bounds = array<i64: 4, 1>}, {transform_indices = @transform_5, window_bounds = array<i64: 4, 128>}]} {
    %c0 = arith.constant 0 : index
    %c0_0 = arith.constant 0 : index
    %0 = vector.load %arg3[%c0, %c0_0] : memref<32x1xf32, #tpu.memory_space<vmem>>, vector<32x1xf32>
    %c0_1 = arith.constant 0 : index
    %c0_2 = arith.constant 0 : index
    %1 = vector.load %arg1[%c0_1, %c0_2] : memref<3x128xf32, #tpu.memory_space<vmem>>, vector<3x128xf32>
    %c0_3 = arith.constant 0 : index
    %c0_4 = arith.constant 0 : index
    %2 = vector.load %arg2[%c0_3, %c0_4] : memref<32x3xf32, #tpu.memory_space<vmem>>, vector<32x3xf32>
    %3 = vector.shape_cast %0 : vector<32x1xf32> to vector<32x1xf32>
    %4 = vector.broadcast %3 : vector<32x1xf32> to vector<32x128xf32>
    %5 = vector.extract_strided_slice %2 {offsets = [0, 0], sizes = [32, 1], strides = [1, 1]} : vector<32x3xf32> to vector<32x1xf32>
    %6 = vector.extract_strided_slice %1 {offsets = [0, 0], sizes = [1, 128], strides = [1, 1]} : vector<3x128xf32> to vector<1x128xf32>
    %7 = vector.broadcast %5 : vector<32x1xf32> to vector<32x128xf32>
    %8 = vector.broadcast %6 : vector<1x128xf32> to vector<32x128xf32>
    %9 = arith.mulf %7, %8 : vector<32x128xf32>
    %10 = arith.addf %4, %9 : vector<32x128xf32>
    %11 = vector.extract_strided_slice %2 {offsets = [0, 1], sizes = [32, 1], strides = [1, 1]} : vector<32x3xf32> to vector<32x1xf32>
    %12 = vector.extract_strided_slice %1 {offsets = [1, 0], sizes = [1, 128], strides = [1, 1]} : vector<3x128xf32> to vector<1x128xf32>
    %13 = vector.broadcast %11 : vector<32x1xf32> to vector<32x128xf32>
    %14 = vector.broadcast %12 : vector<1x128xf32> to vector<32x128xf32>
    %15 = arith.mulf %13, %14 : vector<32x128xf32>
    %16 = arith.addf %10, %15 : vector<32x128xf32>
    %17 = vector.extract_strided_slice %2 {offsets = [0, 2], sizes = [32, 1], strides = [1, 1]} : vector<32x3xf32> to vector<32x1xf32>
    %18 = vector.extract_strided_slice %1 {offsets = [2, 0], sizes = [1, 128], strides = [1, 1]} : vector<3x128xf32> to vector<1x128xf32>
    %19 = vector.broadcast %17 : vector<32x1xf32> to vector<32x128xf32>
    %20 = vector.broadcast %18 : vector<1x128xf32> to vector<32x128xf32>
    %21 = arith.mulf %19, %20 : vector<32x128xf32>
    %22 = arith.addf %16, %21 : vector<32x128xf32>
    %cst = arith.constant 0.000000e+00 : f32
    %23 = vector.broadcast %cst : f32 to vector<32x128xf32>
    %24 = arith.maximumf %22, %23 : vector<32x128xf32>
    %c0_5 = arith.constant 0 : index
    %c0_6 = arith.constant 0 : index
    %25 = vector.load %arg4[%c0_5, %c0_6] : memref<4x32xf32, #tpu.memory_space<vmem>>, vector<4x32xf32>
    %cst_7 = arith.constant dense<0.000000e+00> : vector<4x128xf32>
    %26 = tpu.matmul %25, %24, %cst_7 {dimension_numbers = #tpu.dot_dimension_numbers<[1], [0], [0], [1], [0, 0, 1, 1], [], []>} : vector<4x32xf32>, vector<32x128xf32>, vector<4x128xf32> -> vector<4x128xf32>
    %c0_8 = arith.constant 0 : index
    %c0_9 = arith.constant 0 : index
    %27 = vector.load %arg5[%c0_8, %c0_9] : memref<4x1xf32, #tpu.memory_space<vmem>>, vector<4x1xf32>
    %28 = vector.broadcast %27 : vector<4x1xf32> to vector<4x128xf32>
    %29 = arith.addf %26, %28 : vector<4x128xf32>
    %c0_10 = arith.constant 0 : index
    %c0_11 = arith.constant 0 : index
    %30 = vector.load %arg6[%c0_10, %c0_11] : memref<4x128xf32, #tpu.memory_space<vmem>>, vector<4x128xf32>
    tpu.vector_store %arg6[%c0_10, %c0_11], %29 {strides = array<i32>} : memref<4x128xf32, #tpu.memory_space<vmem>>, vector<4x128xf32>,
    return
  }
  func.func @transform_0(%arg0: i32) -> (i32, i32) {
    %c0_i32 = arith.constant 0 : i32
    %c0_i32_0 = arith.constant 0 : i32
    return %c0_i32, %arg0 : i32, i32
  }
  func.func @transform_1(%arg0: i32) -> (i32, i32) {
    %c0_i32 = arith.constant 0 : i32
    %c0_i32_0 = arith.constant 0 : i32
    %c0_i32_1 = arith.constant 0 : i32
    return %c0_i32, %c0_i32_0 : i32, i32
  }
  func.func @transform_2(%arg0: i32) -> (i32, i32) {
    %c0_i32 = arith.constant 0 : i32
    %c0_i32_0 = arith.constant 0 : i32
    %c0_i32_1 = arith.constant 0 : i32
    return %c0_i32, %c0_i32_0 : i32, i32
  }
  func.func @transform_3(%arg0: i32) -> (i32, i32) {
    %c0_i32 = arith.constant 0 : i32
    %c0_i32_0 = arith.constant 0 : i32
    %c0_i32_1 = arith.constant 0 : i32
    return %c0_i32, %c0_i32_0 : i32, i32
  }
  func.func @transform_4(%arg0: i32) -> (i32, i32) {
    %c0_i32 = arith.constant 0 : i32
    %c0_i32_0 = arith.constant 0 : i32
    %c0_i32_1 = arith.constant 0 : i32
    return %c0_i32, %c0_i32_0 : i32, i32
  }
  func.func @transform_5(%arg0: i32) -> (i32, i32) {
    %c0_i32 = arith.constant 0 : i32
    %c0_i32_0 = arith.constant 0 : i32
    return %c0_i32, %arg0 : i32, i32
  }
}

</mosaic_0001>

<llo_original>
// kernel: nerf_encoding.1
$region0: #{nerf_encoding.1}
  #allocation0 [shape = 'u32[]', space=smem, size = 0x4, offset = 0x4, fixed_abs, tag = 'smem constant byte address 0x4 - core index']
  #allocation1 [shape = 'u32[144,128]{1,0:T(1,128)}', space=vmem, size = 0x12000, scoped, tag = 'internal scratch']
  %s0 = inlined_call_operand.vmem [shape: f32[3,128], index: 0, kind: input, shape index: {}]
  %s1 = inlined_call_operand.vmem [shape: f32[32,3], index: 1, kind: input, shape index: {}]
  %s2 = inlined_call_operand.vmem [shape: f32[32,1], index: 2, kind: input, shape index: {}]
  %s3 = inlined_call_operand.vmem [shape: f32[4,32], index: 3, kind: input, shape index: {}]
  %s4 = inlined_call_operand.vmem [shape: f32[4,1], index: 4, kind: input, shape index: {}]
  %s5 = inlined_call_operand.vmem [shape: f32[4,128], index: 5, kind: output, shape index: {}]
  %s6 = sld [smem:[#allocation0]]
  $region30: #{nerf_encoding.1} parent=0
    _
  %s8 = ssub.s32 1, %s6
  %s9 = scalar_select 0, %s8, %s6
  // Predicated region
  $region2: #{nerf_encoding.1} parent=0 // pred_check
    _
  $region3: #{nerf_encoding.1} parent=0 // pred_check_branch
    %11 = sbr.rel (0) target = $region5
  $region4: #{nerf_encoding.1} parent=0 // pred_region
    _
  $region5: #{nerf_encoding.1} parent=0 // pred_fallthru
    _
  // Predicated region
  $region6: #{nerf_encoding.1} parent=0 // pred_check
    _
  $region7: #{nerf_encoding.1} parent=0 // pred_check_branch
    %13 = sbr.rel (0) target = $region9
  $region8: #{nerf_encoding.1} parent=0 // pred_region
    _
  $region9: #{nerf_encoding.1} parent=0 // pred_fallthru
    _
  // Predicated region
  $region10: #{nerf_encoding.1} parent=0 // pred_check
    _
  $region11: #{nerf_encoding.1} parent=0 // pred_check_branch
    %15 = sbr.rel (0) target = $region13
  $region12: #{nerf_encoding.1} parent=0 // pred_region
    _
  $region13: #{nerf_encoding.1} parent=0 // pred_fallthru
    _
  // Predicated region
  $region14: #{nerf_encoding.1} parent=0 // pred_check
    _
  $region15: #{nerf_encoding.1} parent=0 // pred_check_branch
    %17 = sbr.rel (0) target = $region17
  $region16: #{nerf_encoding.1} parent=0 // pred_region
    _
  $region17: #{nerf_encoding.1} parent=0 // pred_fallthru
    _
  // Predicated region
  $region18: #{nerf_encoding.1} parent=0 // pred_check
    _
  $region19: #{nerf_encoding.1} parent=0 // pred_check_branch
    %19 = sbr.rel (0) target = $region21
  $region20: #{nerf_encoding.1} parent=0 // pred_region
    _
  $region21: #{nerf_encoding.1} parent=0 // pred_fallthru
    _
  %v20 = vld [vmem:[%s2] sm:$0xff]
  %v21 = vld [vmem:[%s2 + $0x8] sm:$0xff]
  %v22 = vld [vmem:[%s2 + $0x10] sm:$0xff]
  %v23 = vld [vmem:[%s2 + $0x18] sm:$0xff]
  %v24 = vld [vmem:[%s0] sm:$0x7]
  %v25 = vld [vmem:[%s1] sm:$0xff]
  %v26 = vld [vmem:[%s1 + $0x8] sm:$0xff]
  %v27 = vld [vmem:[%s1 + $0x10] sm:$0xff]
  %v28 = vld [vmem:[%s1 + $0x18] sm:$0xff]
  %30 = vset.pattern.permute.xlu0 0
  %31 = vperm.xlu0 %30, %v20
  %v32 = vpop.permute.xlu0 %31
  %35 = vset.pattern.permute.xlu0 0
  %36 = vperm.xlu0 %35, %v21
  %v37 = vpop.permute.xlu0 %36
  %40 = vset.pattern.permute.xlu0 0
  %41 = vperm.xlu0 %40, %v22
  %v42 = vpop.permute.xlu0 %41
  %45 = vset.pattern.permute.xlu0 0
  %46 = vperm.xlu0 %45, %v23
  %v47 = vpop.permute.xlu0 %46
  %50 = vset.pattern.permute.xlu0 0
  %51 = vperm.xlu0 %50, %v25
  %v52 = vpop.permute.xlu0 %51
  %55 = vset.pattern.permute.xlu0 0
  %56 = vperm.xlu0 %55, %v26
  %v57 = vpop.permute.xlu0 %56
  %60 = vset.pattern.permute.xlu0 0
  %61 = vperm.xlu0 %60, %v27
  %v62 = vpop.permute.xlu0 %61
  %65 = vset.pattern.permute.xlu0 0
  %66 = vperm.xlu0 %65, %v28
  %v67 = vpop.permute.xlu0 %66
  %v69 = vlaneseq
  %v70 = vshrl.u32 %v69, 7
  %v71 = vsub.s32 0, %v70
  %v72 = vrot.slane %v24, %v71
  %v73 = vmul.f32 %v52, %v72
  %v74 = vmul.f32 %v57, %v72
  %v75 = vmul.f32 %v62, %v72
  %v76 = vmul.f32 %v67, %v72
  %v77 = vadd.f32 %v32, %v73
  %v78 = vadd.f32 %v37, %v74
  %v79 = vadd.f32 %v42, %v75
  %v80 = vadd.f32 %v47, %v76
  %81 = vset.pattern.permute.xlu0 1
  %82 = vperm.xlu0 %81, %v25
  %v83 = vpop.permute.xlu0 %82
  %85 = vset.pattern.permute.xlu0 1
  %86 = vperm.xlu0 %85, %v26
  %v87 = vpop.permute.xlu0 %86
  %89 = vset.pattern.permute.xlu0 1
  %90 = vperm.xlu0 %89, %v27
  %v91 = vpop.permute.xlu0 %90
  %93 = vset.pattern.permute.xlu0 1
  %94 = vperm.xlu0 %93, %v28
  %v95 = vpop.permute.xlu0 %94
  %v97 = vlaneseq
  %v98 = vshrl.u32 %v97, 7
  %v99 = vsub.s32 1, %v98
  %v100 = vrot.slane %v24, %v99
  %v101 = vmul.f32 %v83, %v100
  %v102 = vmul.f32 %v87, %v100
  %v103 = vmul.f32 %v91, %v100
  %v104 = vmul.f32 %v95, %v100
  %v105 = vadd.f32 %v77, %v101
  %v106 = vadd.f32 %v78, %v102
  %v107 = vadd.f32 %v79, %v103
  %v108 = vadd.f32 %v80, %v104
  %109 = vset.pattern.permute.xlu0 2
  %110 = vperm.xlu0 %109, %v25
  %v111 = vpop.permute.xlu0 %110
  %113 = vset.pattern.permute.xlu0 2
  %114 = vperm.xlu0 %113, %v26
  %v115 = vpop.permute.xlu0 %114
  %117 = vset.pattern.permute.xlu0 2
  %118 = vperm.xlu0 %117, %v27
  %v119 = vpop.permute.xlu0 %118
  %121 = vset.pattern.permute.xlu0 2
  %122 = vperm.xlu0 %121, %v28
  %v123 = vpop.permute.xlu0 %122
  %v125 = vlaneseq
  %v126 = vshrl.u32 %v125, 7
  %v127 = vsub.s32 2, %v126
  %v128 = vrot.slane %v24, %v127
  %v129 = vmul.f32 %v111, %v128
  %v130 = vmul.f32 %v115, %v128
  %v131 = vmul.f32 %v119, %v128
  %v132 = vmul.f32 %v123, %v128
  %v133 = vadd.f32 %v105, %v129
  %v134 = vadd.f32 %v106, %v130
  %v135 = vadd.f32 %v107, %v131
  %v136 = vadd.f32 %v108, %v132
  %v137 = vmax.f32 %v133, 0.0
  %v138 = vmax.f32 %v134, 0.0
  %v139 = vmax.f32 %v135, 0.0
  %v140 = vmax.f32 %v136, 0.0
  %v141 = vld [vmem:[%s3] sm:$0xf]
  %v142 = vld [vmem:[%s4] sm:$0xf]
  %144 = vset.pattern.permute.xlu0 0
  %145 = vperm.xlu0 %144, %v142
  %v146 = vpop.permute.xlu0 %145
  %vm148 = vcmask 261120
  %v150 = vsel %vm148, %v141, 0
  %152 = vmatprep.subr.mxu0 0.0
  %153 = vmatpush1.msra.mxu0 0.0
  %154 = vmatprep.subr.mxu0 0.0
  %155 = vmatpush1.msra.mxu0 0.0
  %156 = vmatprep.subr.mxu0 0.0
  %157 = vmatpush1.msra.mxu0 0.0
  %158 = vmatprep.subr.mxu0 0.0
  %159 = vmatpush1.msra.mxu0 0.0
  %160 = vmatprep.subr.mxu0 0.0
  %161 = vmatpush1.msra.mxu0 0.0
  %162 = vmatprep.subr.mxu0 0.0
  %163 = vmatpush1.msra.mxu0 0.0
  %164 = vmatprep.subr.mxu0 0.0
  %165 = vmatpush1.msra.mxu0 0.0
  %166 = vmatprep.subr.mxu0 0.0
  %167 = vmatpush1.msra.mxu0 0.0
  %168 = vmatprep.subr.mxu0 0.0
  %169 = vmatpush1.msra.mxu0 0.0
  %170 = vmatprep.subr.mxu0 0.0
  %171 = vmatpush1.msra.mxu0 0.0
  %172 = vmatprep.subr.mxu0 0.0
  %173 = vmatpush1.msra.mxu0 0.0
  %174 = vmatprep.subr.mxu0 0.0
  %175 = vmatpush1.msra.mxu0 0.0
  %176 = vmatprep.subr.mxu0 0.0
  %177 = vmatpush1.msra.mxu0 %v140
  %178 = vmatprep.subr.mxu0 0.0
  %179 = vmatpush1.msra.mxu0 %v139
  %180 = vmatprep.subr.mxu0 0.0
  %181 = vmatpush1.msra.mxu0 %v138
  %182 = vmatprep.subr.mxu0 0.0
  %183 = vmatpush1.msra.mxu0 %v137
  %184 = vmatprep.subr.mxu0 0.0
  %185 = vmatpush2.msra.mxu0 0.0
  %186 = vmatprep.subr.mxu0 0.0
  %187 = vmatpush2.msra.mxu0 0.0
  %188 = vmatprep.subr.mxu0 0.0
  %189 = vmatpush2.msra.mxu0 0.0
  %190 = vmatprep.subr.mxu0 0.0
  %191 = vmatpush2.msra.mxu0 0.0
  %192 = vmatprep.subr.mxu0 0.0
  %193 = vmatpush2.msra.mxu0 0.0
  %194 = vmatprep.subr.mxu0 0.0
  %195 = vmatpush2.msra.mxu0 0.0
  %196 = vmatprep.subr.mxu0 0.0
  %197 = vmatpush2.msra.mxu0 0.0
  %198 = vmatprep.subr.mxu0 0.0
  %199 = vmatpush2.msra.mxu0 0.0
  %200 = vmatprep.subr.mxu0 0.0
  %201 = vmatpush2.msra.mxu0 0.0
  %202 = vmatprep.subr.mxu0 0.0
  %203 = vmatpush2.msra.mxu0 0.0
  %204 = vmatprep.subr.mxu0 0.0
  %205 = vmatpush2.msra.mxu0 0.0
  %206 = vmatprep.subr.mxu0 0.0
  %207 = vmatpush2.msra.mxu0 0.0
  %208 = vmatprep.subr.mxu0 0.0
  %209 = vmatpush2.msra.mxu0 0.0
  %210 = vmatprep.subr.mxu0 0.0
  %211 = vmatpush2.msra.mxu0 0.0
  %212 = vmatprep.subr.mxu0 0.0
  %213 = vmatpush2.msra.mxu0 0.0
  %214 = vmatprep.subr.mxu0 0.0
  %215 = vmatpush2.msra.mxu0 0.0
  %216 = vmatprep.mubr.f32.mxu0 0.0
  %217 = vmatmul.mubr.f32.gmra.mxu0 %v150
  %v218 = vpop.f32.mrf.mxu0
  %v219 = vadd.f32 %v146, %v218
  %v220 = vpop.f32.mrf.mxu0
  %221 = vdwg.mxu0
  %222 = vst [vmem:[%s5] sm:$0xf] %v219
  // Predicated region
  $region22: #{nerf_encoding.1} parent=0 // pred_check
    _
  $region23: #{nerf_encoding.1} parent=0 // pred_check_branch
    %224 = sbr.rel (0) target = $region25
  $region24: #{nerf_encoding.1} parent=0 // pred_region
    _
  $region25: #{nerf_encoding.1} parent=0 // pred_fallthru
    _
  // Predicated region
  $region26: #{nerf_encoding.1} parent=0 // pred_check
    _
  $region27: #{nerf_encoding.1} parent=0 // pred_check_branch
    %226 = sbr.rel (0) target = $region29
  $region28: #{nerf_encoding.1} parent=0 // pred_region
    _
  $region29: #{nerf_encoding.1} parent=0 // pred_fallthru
    _

</llo_original>
